<compile_context>
chip_gen: v7x
topology: tpu7x:2x2x1
jax: 0.10.0
libtpu: 0.0.40
codegen_flags: <defaults>
</compile_context>

<pallas_src>
import functools

import jax
import jax.numpy as jnp
from jax import lax
from jax.experimental import pallas as pl
from jax.experimental.pallas import tpu as pltpu


def _round_up(v, m):
    return ((v + m - 1) // m) * m


# ---------------------------------------------------------------------------
# Fused kernel: one image per grid step.
# ---------------------------------------------------------------------------
def _fused_conv_kernel(x_ref, cmask_ref, padmask_ref, w1_ref, b1_ref,
                       w2_ref, b2_ref, w3_ref, b3_ref, o_ref,
                       y1s_ref, stk_ref, *, W1, k, GL, apply_padmask):
    """Per-step shapes (Mpad = round_up(H1*W1, 128), the lane axis):
         x_ref    : (1, Cin, Mpad)          bf16
         cmask    : (k, Mpad)               bf16   column validity per kw tap
         padmask  : (1, Mpad)               f32    1.0 where flat index < H1*W1
         w1       : (mid_p, Cin)            bf16   BN1 scale folded in
         b1       : (mid_p, 1)              f32
         w2       : (mid_p, k*k*mid_p)      bf16   tap-stacked, BN2 folded in
         b2       : (mid_p, 1)              f32
         w3       : (Cout, mid_p)           bf16   BN3 scale folded in
         b3       : (Cout, 1)               f32
         o_ref    : (1, Cout, Mpad)         f32
         y1s_ref  : (mid_p, GL+Mpad+GRpad)  bf16   zero-guarded stage-1 slab
         stk_ref  : (k*k*mid_p, Mpad)       bf16   stacked shifted activations
    """
    Mpad = x_ref.shape[-1]
    mid_p = w1_ref.shape[0]
    cdt = y1s_ref.dtype

    # ---- stage 1: 1x1 conv (+ folded BN) + ReLU (f32 accumulate) ----------
    y1 = jnp.dot(w1_ref[...], x_ref[0], preferred_element_type=jnp.float32)
    y1 = jnp.maximum(y1 + b1_ref[...], 0.0)
    if apply_padmask:                       # kill junk in lane-padding columns
        y1 = y1 * padmask_ref[...]

    # Zero only the (lane-aligned, tiny) guard bands; the slab interior is
    # fully overwritten every step.  Per-step (not @pl.when(pid==0)) so the
    # scratch is valid on whichever core a "parallel" batch step lands on.
    GRpad = y1s_ref.shape[1] - GL - Mpad
    y1s_ref[:, :GL] = jnp.zeros((mid_p, GL), cdt)
    y1s_ref[:, GL + Mpad:] = jnp.zeros((mid_p, GRpad), cdt)
    y1s_ref[:, GL:GL + Mpad] = y1.astype(cdt)

    # ---- stage 2: kxk conv (pad=1) as ONE stacked MXU contraction ---------
    # dest p=(i,j); tap (di,dj) reads y1[i+di-1, j+dj-1], i.e. flat offset
    # (di-1)*W1 + (dj-1).  Row under/overflow reads the zero guards; column
    # overflow is killed once per tap while the stack is built.
    for di in range(k):
        for dj in range(k):
            off = (di - 1) * W1 + (dj - 1)
            v = y1s_ref[:, GL + off:GL + off + Mpad]          # (mid_p, Mpad)
            if dj != 1:                                       # dj==1 never overflows
                v = v * cmask_ref[dj:dj + 1, :]
            t = di * k + dj
            stk_ref[t * mid_p:(t + 1) * mid_p, :] = v
    y2 = jnp.dot(w2_ref[...], stk_ref[...], preferred_element_type=jnp.float32)
    y2 = jnp.maximum(y2 + b2_ref[...], 0.0)

    # ---- stage 3: 1x1 conv (+ folded BN) + ReLU, lane-dense f32 store -----
    y3 = jnp.dot(w3_ref[...], y2.astype(cdt), preferred_element_type=jnp.float32)
    o_ref[0] = jnp.maximum(y3 + b3_ref[...], 0.0)


# ---------------------------------------------------------------------------
# Wrapper: BN folding, channel/lane padding, pallas_call.
# ---------------------------------------------------------------------------
def conv_block_forward(x_nchw, params, kernel_size, padding,
                       compute_dtype=jnp.bfloat16):
    """Forward of Conv(in, out, kernel_size, stride, padding).

    BatchNorm is folded in inference (running-stats) mode.  All convs are
    stride 1 (the module hard-codes stride=(1,1) and never uses its stride
    arg).  MXU operands use `compute_dtype` (bf16), accumulation and the
    bias/ReLU epilogues are f32.
    """
    k = int(kernel_size)
    # TODO(synk): kernel_size < 3 (with the module's fixed conv2 padding=1)
    # would make the conv2 output larger than the conv1 grid; unsupported here.
    assert k >= 3, "kernel_size must be >= 3"

    x = x_nchw.astype(jnp.float32)
    N, Cin, H, W = x.shape
    p = int(padding)
    if p:
        x = jnp.pad(x, ((0, 0), (0, 0), (p, p), (p, p)))
    H1, W1 = H + 2 * p, W + 2 * p
    M = H1 * W1
    Mpad = _round_up(M, 128)                     # lane-dense spatial axis

    mid = params["w1"].shape[0]
    cout = params["w3"].shape[0]
    itm = jnp.dtype(compute_dtype).itemsize
    # pad internal channel dim to the sublane packing of compute_dtype
    mid_p = _round_up(mid, 8 * (4 // itm))       # 8 rows f32 / 16 rows bf16

    eps = 1e-5

    def fold(w2d, b, bn):                        # fold BN scale into weights
        g, beta, mean, var = bn
        s = g / jnp.sqrt(var + eps)
        return w2d * s[:, None], (b - mean) * s + beta

    # stage 1 weights: (mid_p, Cin)
    w1, b1 = fold(params["w1"].reshape(mid, Cin), params["b1"], params["bn1"])
    w1 = jnp.pad(w1, ((0, mid_p - mid), (0, 0))).astype(compute_dtype)
    b1 = jnp.pad(b1, (0, mid_p - mid))[:, None]                  # f32 (mid_p,1)

    # stage 2 weights, tap-stacked: column block t*mid_p.. holds tap t=di*k+dj
    w2, b2 = fold(params["w2"].reshape(mid, -1), params["b2"], params["bn2"])
    w2 = w2.reshape(mid, mid, k, k)
    w2 = jnp.pad(w2, ((0, mid_p - mid), (0, mid_p - mid), (0, 0), (0, 0)))
    w2 = jnp.transpose(w2, (0, 2, 3, 1)).reshape(mid_p, k * k * mid_p)
    w2 = w2.astype(compute_dtype)
    b2 = jnp.pad(b2, (0, mid_p - mid))[:, None]                  # f32 (mid_p,1)

    # stage 3 weights: (cout, mid_p)
    w3, b3 = fold(params["w3"].reshape(cout, mid), params["b3"], params["bn3"])
    w3 = jnp.pad(w3, ((0, 0), (0, mid_p - mid))).astype(compute_dtype)
    b3 = b3[:, None]                                             # f32 (cout,1)

    # per-tap column-validity mask: valid iff 0 <= (p mod W1) + dj - 1 < W1
    jcol = jnp.arange(Mpad, dtype=jnp.int32) % W1
    src = jcol[None, :] + jnp.arange(k, dtype=jnp.int32)[:, None] - 1
    cmask = ((src >= 0) & (src < W1)).astype(compute_dtype)      # (k, Mpad)
    # lane-padding validity (flat spatial index < M)
    padmask = (jnp.arange(Mpad, dtype=jnp.int32) < M
               ).astype(jnp.float32)[None, :]                    # (1, Mpad)

    # NCHW is already channel-major: (N,C,H1,W1)->(N,C,M) is a pure reshape;
    # pad the flattened spatial axis up to Mpad lanes.
    x3 = x.reshape(N, Cin, M)
    if Mpad > M:
        x3 = jnp.pad(x3, ((0, 0), (0, 0), (0, Mpad - M)))
    x3 = x3.astype(compute_dtype)

    GL = _round_up(W1 + 1, 128)                    # 128-aligned left guard
    GRpad = _round_up((k - 2) * (W1 + 1), 128)     # 128-aligned right guard

    kern = functools.partial(_fused_conv_kernel, W1=W1, k=k, GL=GL,
                             apply_padmask=(Mpad > M))

    # grid-invariant operands: fetched once, single-buffered
    def _const(shape):
        return pl.BlockSpec(shape, lambda n: (0,) * len(shape),
                            pipeline_mode=pl.Buffered(buffer_count=1))

    # per-step VMEM footprint -> right-sized scoped-vmem limit (v7x has 64 MiB)
    per_step = (
        2 * Cin * Mpad * itm                       # x block (double-buffered)
        + 2 * cout * Mpad * 4                      # out block (double-buffered)
        + (k + 1) * Mpad * 4                       # masks (f32 upper bound)
        + (mid_p * Cin + mid_p * k * k * mid_p + cout * mid_p) * itm
        + (2 * mid_p + cout) * 4                   # biases
        + mid_p * (GL + Mpad + GRpad) * itm        # guarded slab scratch
        + k * k * mid_p * Mpad * itm)              # stacked-tap scratch
    vmem_limit = int(min(64 << 20, max(16 << 20, 2 * per_step + (2 << 20))))

    flops = 2 * N * Mpad * (mid_p * Cin + k * k * mid_p * mid_p + cout * mid_p)
    bytes_accessed = (N * Cin * Mpad * itm + N * cout * Mpad * 4
                      + (mid_p * Cin + mid_p * k * k * mid_p
                         + cout * mid_p) * itm
                      + (k + 1) * Mpad * 4 + (2 * mid_p + cout) * 4)

    out = pl.pallas_call(
        kern,
        out_shape=jax.ShapeDtypeStruct((N, cout, Mpad), jnp.float32),
        grid_spec=pltpu.PrefetchScalarGridSpec(
            num_scalar_prefetch=0,
            grid=(N,),
            in_specs=[
                pl.BlockSpec((1, Cin, Mpad), lambda n: (n, 0, 0)),
                _const((k, Mpad)),
                _const((1, Mpad)),
                _const((mid_p, Cin)),
                _const((mid_p, 1)),
                _const((mid_p, k * k * mid_p)),
                _const((mid_p, 1)),
                _const((cout, mid_p)),
                _const((cout, 1)),
            ],
            out_specs=pl.BlockSpec((1, cout, Mpad), lambda n: (n, 0, 0)),
            scratch_shapes=[
                pltpu.VMEM((mid_p, GL + Mpad + GRpad), compute_dtype),
                pltpu.VMEM((k * k * mid_p, Mpad), compute_dtype),
            ],
        ),
        compiler_params=pltpu.CompilerParams(
            dimension_semantics=("parallel",),     # batch steps feed both v7x TCs
            vmem_limit_bytes=vmem_limit,
        ),
        cost_estimate=pl.CostEstimate(
            flops=int(flops), transcendentals=0,
            bytes_accessed=int(bytes_accessed)),
    )(x3, cmask, padmask, w1, b1, w2, b2, w3, b3)

    # TODO(synk): for very large images whose per-step blocks exceed the v7x
    # 64 MiB VMEM budget, add a halo'd spatial-tile grid axis; for tiny images
    # with large batch, pack several images per step along the lane axis.

    # valid spatial extent of the kxk conv (pad=1, stride 1)
    H2, W2 = H1 - k + 3, W1 - k + 3
    out = out[:, :, :M].reshape(N, cout, H1, W1)
    return out[:, :, :H2, :W2]                                   # NCHW


# ---------------------------------------------------------------------------
# Parameter init (same structure as the PyTorch module) and a pure-JAX reference.
# ---------------------------------------------------------------------------
def init_params(key, in_channels, out_channels, kernel_size):
    mid = out_channels // 4
    ks = jax.random.split(key, 16)

    def conv_w(k_, cout_, cin_, kh, kw):
        return 0.1 * jax.random.normal(k_, (cout_, cin_, kh, kw), jnp.float32)

    def bn(k_, c):
        k1, k2, k3, k4 = jax.random.split(k_, 4)
        gamma = 1.0 + 0.1 * jax.random.normal(k1, (c,), jnp.float32)
        beta = 0.1 * jax.random.normal(k2, (c,), jnp.float32)
        mean = 0.1 * jax.random.normal(k3, (c,), jnp.float32)
        var = 1.0 + 0.05 * jax.random.uniform(k4, (c,), jnp.float32)
        return gamma, beta, mean, var

    return {
        "w1": conv_w(ks[0], mid, in_channels, 1, 1),
        "b1": 0.1 * jax.random.normal(ks[1], (mid,), jnp.float32),
        "bn1": bn(ks[2], mid),
        "w2": conv_w(ks[3], mid, mid, kernel_size, kernel_size),
        "b2": 0.1 * jax.random.normal(ks[4], (mid,), jnp.float32),
        "bn2": bn(ks[5], mid),
        "w3": conv_w(ks[6], out_channels, mid, 1, 1),
        "b3": 0.1 * jax.random.normal(ks[7], (out_channels,), jnp.float32),
        "bn3": bn(ks[8], out_channels),
    }


def _reference_forward(x_nchw, params, kernel_size, padding, eps=1e-5):
    # TODO(synk): BatchNorm folded with running stats (inference mode); PyTorch
    # training-mode batch statistics are not reproduced.
    def conv(x, w, b, pad):
        y = lax.conv_general_dilated(
            x, w, window_strides=(1, 1), padding=[(pad, pad), (pad, pad)],
            dimension_numbers=("NCHW", "OIHW", "NCHW"),
            precision=lax.Precision.HIGHEST)
        return y + b[None, :, None, None]

    def bn(x, stats):
        g, beta, mean, var = stats
        inv = g / jnp.sqrt(var + eps)
        return (x - mean[None, :, None, None]) * inv[None, :, None, None] \
            + beta[None, :, None, None]

    y = jax.nn.relu(bn(conv(x_nchw, params["w1"], params["b1"], padding), params["bn1"]))
    y = jax.nn.relu(bn(conv(y, params["w2"], params["b2"], 1), params["bn2"]))
    y = jax.nn.relu(bn(conv(y, params["w3"], params["b3"], 0), params["bn3"]))
    return y


if __name__ == "__main__":
    in_channels, out_channels = 4, 8
    kernel_size, stride, padding = 3, 1, 0   # stride unused by the PyTorch module

    key = jax.random.PRNGKey(0)
    kx, kp = jax.random.split(key)
    x = jax.random.normal(kx, (2, in_channels, 16, 16), jnp.float32)  # NCHW
    params = init_params(kp, in_channels, out_channels, kernel_size)

    fwd = jax.jit(functools.partial(conv_block_forward,
                                    kernel_size=kernel_size, padding=padding))
    out = fwd(x, params)
    jax.block_until_ready(out)

    assert out.shape == (2, out_channels, 16, 16), out.shape
    assert bool(jnp.all(out >= 0.0))          # ReLU output

    ref = _reference_forward(x, params, kernel_size, padding)
    max_err = float(jnp.max(jnp.abs(out - ref)))
    # bf16 MXU operands with f32 accumulation: allow a bf16-level tolerance.
    assert max_err < 2e-2, f"max abs err vs reference: {max_err}"

    print("KERNEL_OK")
</pallas_src>

<mosaic_0001>
module attributes {stable_mosaic.version = 11 : i64} {
  func.func @_fused_conv_kernel(%arg0: i32, %arg1: memref<1x4x256xbf16, #tpu.memory_space<vmem>>, %arg2: memref<3x256xbf16, #tpu.memory_space<vmem>>, %arg3: memref<1x256xf32, #tpu.memory_space<vmem>>, %arg4: memref<16x4xbf16, #tpu.memory_space<vmem>>, %arg5: memref<16x1xf32, #tpu.memory_space<vmem>>, %arg6: memref<16x144xbf16, #tpu.memory_space<vmem>>, %arg7: memref<16x1xf32, #tpu.memory_space<vmem>>, %arg8: memref<8x16xbf16, #tpu.memory_space<vmem>>, %arg9: memref<8x1xf32, #tpu.memory_space<vmem>>, %arg10: memref<1x8x256xf32, #tpu.memory_space<vmem>>, %arg11: memref<16x512xbf16, #tpu.memory_space<vmem>>, %arg12: memref<144x256xbf16, #tpu.memory_space<vmem>>) attributes {dimension_semantics = [#tpu.dimension_semantics<parallel>], iteration_bounds = array<i64: 2>, scalar_prefetch = 0 : i64, scratch_operands = 2 : i64, tpu.core_type = #tpu.core_type<tc>, window_params = [{transform_indices = @transform_0, window_bounds = array<i64: 1, 4, 256>}, {pipeline_mode = #tpu.pipeline_mode<synchronous>, transform_indices = @transform_1, window_bounds = array<i64: 3, 256>}, {pipeline_mode = #tpu.pipeline_mode<synchronous>, transform_indices = @transform_2, window_bounds = array<i64: 1, 256>}, {pipeline_mode = #tpu.pipeline_mode<synchronous>, transform_indices = @transform_3, window_bounds = array<i64: 16, 4>}, {pipeline_mode = #tpu.pipeline_mode<synchronous>, transform_indices = @transform_4, window_bounds = array<i64: 16, 1>}, {pipeline_mode = #tpu.pipeline_mode<synchronous>, transform_indices = @transform_5, window_bounds = array<i64: 16, 144>}, {pipeline_mode = #tpu.pipeline_mode<synchronous>, transform_indices = @transform_6, window_bounds = array<i64: 16, 1>}, {pipeline_mode = #tpu.pipeline_mode<synchronous>, transform_indices = @transform_7, window_bounds = array<i64: 8, 16>}, {pipeline_mode = #tpu.pipeline_mode<synchronous>, transform_indices = @transform_8, window_bounds = array<i64: 8, 1>}, {transform_indices = @transform_9, window_bounds = array<i64: 1, 8, 256>}]} {
    %c0 = arith.constant 0 : index
    %c0_0 = arith.constant 0 : index
    %0 = vector.load %arg4[%c0, %c0_0] : memref<16x4xbf16, #tpu.memory_space<vmem>>, vector<16x4xbf16>
    %c0_1 = arith.constant 0 : index
    %c0_2 = arith.constant 0 : index
    %c0_3 = arith.constant 0 : index
    %1 = vector.load %arg1[%c0_1, %c0_2, %c0_3] : memref<1x4x256xbf16, #tpu.memory_space<vmem>>, vector<1x4x256xbf16>
    %2 = vector.shape_cast %1 : vector<1x4x256xbf16> to vector<4x256xbf16>
    %cst = arith.constant dense<0.000000e+00> : vector<16x256xf32>
    %3 = tpu.matmul %0, %2, %cst {dimension_numbers = #tpu.dot_dimension_numbers<[1], [0], [0], [1], [0, 0, 1, 1], [], []>} : vector<16x4xbf16>, vector<4x256xbf16>, vector<16x256xf32> -> vector<16x256xf32>
    %c0_4 = arith.constant 0 : index
    %c0_5 = arith.constant 0 : index
    %4 = vector.load %arg5[%c0_4, %c0_5] : memref<16x1xf32, #tpu.memory_space<vmem>>, vector<16x1xf32>
    %5 = vector.broadcast %4 : vector<16x1xf32> to vector<16x256xf32>
    %6 = arith.addf %3, %5 : vector<16x256xf32>
    %cst_6 = arith.constant 0.000000e+00 : f32
    %7 = vector.broadcast %cst_6 : f32 to vector<16x256xf32>
    %8 = arith.maximumf %6, %7 : vector<16x256xf32>
    %cst_7 = arith.constant 0.000000e+00 : bf16
    %9 = vector.broadcast %cst_7 : bf16 to vector<16x128xbf16>
    %c0_8 = arith.constant 0 : index
    %c0_9 = arith.constant 0 : index
    %10 = vector.load %arg11[%c0_8, %c0_9] : memref<16x512xbf16, #tpu.memory_space<vmem>>, vector<16x128xbf16>
    tpu.vector_store %arg11[%c0_8, %c0_9], %9 {strides = array<i32>} : memref<16x512xbf16, #tpu.memory_space<vmem>>, vector<16x128xbf16>,
    %cst_10 = arith.constant 0.000000e+00 : bf16
    %11 = vector.broadcast %cst_10 : bf16 to vector<16x128xbf16>
    %c0_11 = arith.constant 0 : index
    %c384 = arith.constant 384 : index
    %12 = vector.load %arg11[%c0_11, %c384] : memref<16x512xbf16, #tpu.memory_space<vmem>>, vector<16x128xbf16>
    tpu.vector_store %arg11[%c0_11, %c384], %11 {strides = array<i32>} : memref<16x512xbf16, #tpu.memory_space<vmem>>, vector<16x128xbf16>,
    %13 = arith.truncf %8 : vector<16x256xf32> to vector<16x256xbf16>
    %c0_12 = arith.constant 0 : index
    %c128 = arith.constant 128 : index
    %14 = vector.load %arg11[%c0_12, %c128] : memref<16x512xbf16, #tpu.memory_space<vmem>>, vector<16x256xbf16>
    tpu.vector_store %arg11[%c0_12, %c128], %13 {strides = array<i32>} : memref<16x512xbf16, #tpu.memory_space<vmem>>, vector<16x256xbf16>,
    %c0_13 = arith.constant 0 : index
    %c111 = arith.constant 111 : index
    %15 = vector.load %arg11[%c0_13, %c111] : memref<16x512xbf16, #tpu.memory_space<vmem>>, vector<16x256xbf16>
    %c0_14 = arith.constant 0 : index
    %c0_15 = arith.constant 0 : index
    %16 = vector.load %arg2[%c0_14, %c0_15] : memref<3x256xbf16, #tpu.memory_space<vmem>>, vector<1x256xbf16>
    %17 = vector.broadcast %16 : vector<1x256xbf16> to vector<16x256xbf16>
    %18 = arith.mulf %15, %17 : vector<16x256xbf16>
    %c0_16 = arith.constant 0 : index
    %c0_17 = arith.constant 0 : index
    %19 = vector.load %arg12[%c0_16, %c0_17] : memref<144x256xbf16, #tpu.memory_space<vmem>>, vector<16x256xbf16>
    tpu.vector_store %arg12[%c0_16, %c0_17], %18 {strides = array<i32>} : memref<144x256xbf16, #tpu.memory_space<vmem>>, vector<16x256xbf16>,
    %c0_18 = arith.constant 0 : index
    %c112 = arith.constant 112 : index
    %20 = vector.load %arg11[%c0_18, %c112] : memref<16x512xbf16, #tpu.memory_space<vmem>>, vector<16x256xbf16>
    %c16 = arith.constant 16 : index
    %c0_19 = arith.constant 0 : index
    %21 = vector.load %arg12[%c16, %c0_19] : memref<144x256xbf16, #tpu.memory_space<vmem>>, vector<16x256xbf16>
    tpu.vector_store %arg12[%c16, %c0_19], %20 {strides = array<i32>} : memref<144x256xbf16, #tpu.memory_space<vmem>>, vector<16x256xbf16>,
    %c0_20 = arith.constant 0 : index
    %c113 = arith.constant 113 : index
    %22 = vector.load %arg11[%c0_20, %c113] : memref<16x512xbf16, #tpu.memory_space<vmem>>, vector<16x256xbf16>
    %c2 = arith.constant 2 : index
    %c0_21 = arith.constant 0 : index
    %23 = vector.load %arg2[%c2, %c0_21] : memref<3x256xbf16, #tpu.memory_space<vmem>>, vector<1x256xbf16>
    %24 = vector.broadcast %23 : vector<1x256xbf16> to vector<16x256xbf16>
    %25 = arith.mulf %22, %24 : vector<16x256xbf16>
    %c32 = arith.constant 32 : index
    %c0_22 = arith.constant 0 : index
    %26 = vector.load %arg12[%c32, %c0_22] : memref<144x256xbf16, #tpu.memory_space<vmem>>, vector<16x256xbf16>
    tpu.vector_store %arg12[%c32, %c0_22], %25 {strides = array<i32>} : memref<144x256xbf16, #tpu.memory_space<vmem>>, vector<16x256xbf16>,
    %c0_23 = arith.constant 0 : index
    %c127 = arith.constant 127 : index
    %27 = vector.load %arg11[%c0_23, %c127] : memref<16x512xbf16, #tpu.memory_space<vmem>>, vector<16x256xbf16>
    %c0_24 = arith.constant 0 : index
    %c0_25 = arith.constant 0 : index
    %28 = vector.load %arg2[%c0_24, %c0_25] : memref<3x256xbf16, #tpu.memory_space<vmem>>, vector<1x256xbf16>
    %29 = vector.broadcast %28 : vector<1x256xbf16> to vector<16x256xbf16>
    %30 = arith.mulf %27, %29 : vector<16x256xbf16>
    %c48 = arith.constant 48 : index
    %c0_26 = arith.constant 0 : index
    %31 = vector.load %arg12[%c48, %c0_26] : memref<144x256xbf16, #tpu.memory_space<vmem>>, vector<16x256xbf16>
    tpu.vector_store %arg12[%c48, %c0_26], %30 {strides = array<i32>} : memref<144x256xbf16, #tpu.memory_space<vmem>>, vector<16x256xbf16>,
    %c0_27 = arith.constant 0 : index
    %c128_28 = arith.constant 128 : index
    %32 = vector.load %arg11[%c0_27, %c128_28] : memref<16x512xbf16, #tpu.memory_space<vmem>>, vector<16x256xbf16>
    %c64 = arith.constant 64 : index
    %c0_29 = arith.constant 0 : index
    %33 = vector.load %arg12[%c64, %c0_29] : memref<144x256xbf16, #tpu.memory_space<vmem>>, vector<16x256xbf16>
    tpu.vector_store %arg12[%c64, %c0_29], %32 {strides = array<i32>} : memref<144x256xbf16, #tpu.memory_space<vmem>>, vector<16x256xbf16>,
    %c0_30 = arith.constant 0 : index
    %c129 = arith.constant 129 : index
    %34 = vector.load %arg11[%c0_30, %c129] : memref<16x512xbf16, #tpu.memory_space<vmem>>, vector<16x256xbf16>
    %c2_31 = arith.constant 2 : index
    %c0_32 = arith.constant 0 : index
    %35 = vector.load %arg2[%c2_31, %c0_32] : memref<3x256xbf16, #tpu.memory_space<vmem>>, vector<1x256xbf16>
    %36 = vector.broadcast %35 : vector<1x256xbf16> to vector<16x256xbf16>
    %37 = arith.mulf %34, %36 : vector<16x256xbf16>
    %c80 = arith.constant 80 : index
    %c0_33 = arith.constant 0 : index
    %38 = vector.load %arg12[%c80, %c0_33] : memref<144x256xbf16, #tpu.memory_space<vmem>>, vector<16x256xbf16>
    tpu.vector_store %arg12[%c80, %c0_33], %37 {strides = array<i32>} : memref<144x256xbf16, #tpu.memory_space<vmem>>, vector<16x256xbf16>,
    %c0_34 = arith.constant 0 : index
    %c143 = arith.constant 143 : index
    %39 = vector.load %arg11[%c0_34, %c143] : memref<16x512xbf16, #tpu.memory_space<vmem>>, vector<16x256xbf16>
    %c0_35 = arith.constant 0 : index
    %c0_36 = arith.constant 0 : index
    %40 = vector.load %arg2[%c0_35, %c0_36] : memref<3x256xbf16, #tpu.memory_space<vmem>>, vector<1x256xbf16>
    %41 = vector.broadcast %40 : vector<1x256xbf16> to vector<16x256xbf16>
    %42 = arith.mulf %39, %41 : vector<16x256xbf16>
    %c96 = arith.constant 96 : index
    %c0_37 = arith.constant 0 : index
    %43 = vector.load %arg12[%c96, %c0_37] : memref<144x256xbf16, #tpu.memory_space<vmem>>, vector<16x256xbf16>
    tpu.vector_store %arg12[%c96, %c0_37], %42 {strides = array<i32>} : memref<144x256xbf16, #tpu.memory_space<vmem>>, vector<16x256xbf16>,
    %c0_38 = arith.constant 0 : index
    %c144 = arith.constant 144 : index
    %44 = vector.load %arg11[%c0_38, %c144] : memref<16x512xbf16, #tpu.memory_space<vmem>>, vector<16x256xbf16>
    %c112_39 = arith.constant 112 : index
    %c0_40 = arith.constant 0 : index
    %45 = vector.load %arg12[%c112_39, %c0_40] : memref<144x256xbf16, #tpu.memory_space<vmem>>, vector<16x256xbf16>
    tpu.vector_store %arg12[%c112_39, %c0_40], %44 {strides = array<i32>} : memref<144x256xbf16, #tpu.memory_space<vmem>>, vector<16x256xbf16>,
    %c0_41 = arith.constant 0 : index
    %c145 = arith.constant 145 : index
    %46 = vector.load %arg11[%c0_41, %c145] : memref<16x512xbf16, #tpu.memory_space<vmem>>, vector<16x256xbf16>
    %c2_42 = arith.constant 2 : index
    %c0_43 = arith.constant 0 : index
    %47 = vector.load %arg2[%c2_42, %c0_43] : memref<3x256xbf16, #tpu.memory_space<vmem>>, vector<1x256xbf16>
    %48 = vector.broadcast %47 : vector<1x256xbf16> to vector<16x256xbf16>
    %49 = arith.mulf %46, %48 : vector<16x256xbf16>
    %c128_44 = arith.constant 128 : index
    %c0_45 = arith.constant 0 : index
    %50 = vector.load %arg12[%c128_44, %c0_45] : memref<144x256xbf16, #tpu.memory_space<vmem>>, vector<16x256xbf16>
    tpu.vector_store %arg12[%c128_44, %c0_45], %49 {strides = array<i32>} : memref<144x256xbf16, #tpu.memory_space<vmem>>, vector<16x256xbf16>,
    %c0_46 = arith.constant 0 : index
    %c0_47 = arith.constant 0 : index
    %51 = vector.load %arg6[%c0_46, %c0_47] : memref<16x144xbf16, #tpu.memory_space<vmem>>, vector<16x144xbf16>
    %c0_48 = arith.constant 0 : index
    %c0_49 = arith.constant 0 : index
    %52 = vector.load %arg12[%c0_48, %c0_49] : memref<144x256xbf16, #tpu.memory_space<vmem>>, vector<144x256xbf16>
    %cst_50 = arith.constant dense<0.000000e+00> : vector<16x256xf32>
    %53 = tpu.matmul %51, %52, %cst_50 {dimension_numbers = #tpu.dot_dimension_numbers<[1], [0], [0], [1], [0, 0, 1, 1], [], []>} : vector<16x144xbf16>, vector<144x256xbf16>, vector<16x256xf32> -> vector<16x256xf32>
    %c0_51 = arith.constant 0 : index
    %c0_52 = arith.constant 0 : index
    %54 = vector.load %arg7[%c0_51, %c0_52] : memref<16x1xf32, #tpu.memory_space<vmem>>, vector<16x1xf32>
    %55 = vector.broadcast %54 : vector<16x1xf32> to vector<16x256xf32>
    %56 = arith.addf %53, %55 : vector<16x256xf32>
    %cst_53 = arith.constant 0.000000e+00 : f32
    %57 = vector.broadcast %cst_53 : f32 to vector<16x256xf32>
    %58 = arith.maximumf %56, %57 : vector<16x256xf32>
    %c0_54 = arith.constant 0 : index
    %c0_55 = arith.constant 0 : index
    %59 = vector.load %arg8[%c0_54, %c0_55] : memref<8x16xbf16, #tpu.memory_space<vmem>>, vector<8x16xbf16>
    %60 = arith.truncf %58 : vector<16x256xf32> to vector<16x256xbf16>
    %cst_56 = arith.constant dense<0.000000e+00> : vector<8x256xf32>
    %61 = tpu.matmul %59, %60, %cst_56 {dimension_numbers = #tpu.dot_dimension_numbers<[1], [0], [0], [1], [0, 0, 1, 1], [], []>} : vector<8x16xbf16>, vector<16x256xbf16>, vector<8x256xf32> -> vector<8x256xf32>
    %c0_57 = arith.constant 0 : index
    %c0_58 = arith.constant 0 : index
    %62 = vector.load %arg9[%c0_57, %c0_58] : memref<8x1xf32, #tpu.memory_space<vmem>>, vector<8x1xf32>
    %63 = vector.broadcast %62 : vector<8x1xf32> to vector<8x256xf32>
    %64 = arith.addf %61, %63 : vector<8x256xf32>
    %cst_59 = arith.constant 0.000000e+00 : f32
    %65 = vector.broadcast %cst_59 : f32 to vector<8x256xf32>
    %66 = arith.maximumf %64, %65 : vector<8x256xf32>
    %c0_60 = arith.constant 0 : index
    %c0_61 = arith.constant 0 : index
    %c0_62 = arith.constant 0 : index
    %67 = vector.load %arg10[%c0_60, %c0_61, %c0_62] : memref<1x8x256xf32, #tpu.memory_space<vmem>>, vector<1x8x256xf32>
    %68 = vector.shape_cast %67 : vector<1x8x256xf32> to vector<8x256xf32>
    %69 = vector.shape_cast %66 : vector<8x256xf32> to vector<1x8x256xf32>
    tpu.vector_store %arg10[%c0_60, %c0_61, %c0_62], %69 {strides = array<i32>} : memref<1x8x256xf32, #tpu.memory_space<vmem>>, vector<1x8x256xf32>,
    return
  }
  func.func @transform_0(%arg0: i32) -> (i32, i32, i32) {
    %c0_i32 = arith.constant 0 : i32
    %c0_i32_0 = arith.constant 0 : i32
    %c0_i32_1 = arith.constant 0 : i32
    return %arg0, %c0_i32, %c0_i32_0 : i32, i32, i32
  }
  func.func @transform_1(%arg0: i32) -> (i32, i32) {
    %c0_i32 = arith.constant 0 : i32
    %c0_i32_0 = arith.constant 0 : i32
    %c0_i32_1 = arith.constant 0 : i32
    return %c0_i32, %c0_i32_0 : i32, i32
  }
  func.func @transform_2(%arg0: i32) -> (i32, i32) {
    %c0_i32 = arith.constant 0 : i32
    %c0_i32_0 = arith.constant 0 : i32
    %c0_i32_1 = arith.constant 0 : i32
    return %c0_i32, %c0_i32_0 : i32, i32
  }
  func.func @transform_3(%arg0: i32) -> (i32, i32) {
    %c0_i32 = arith.constant 0 : i32
    %c0_i32_0 = arith.constant 0 : i32
    %c0_i32_1 = arith.constant 0 : i32
    return %c0_i32, %c0_i32_0 : i32, i32
  }
  func.func @transform_4(%arg0: i32) -> (i32, i32) {
    %c0_i32 = arith.constant 0 : i32
    %c0_i32_0 = arith.constant 0 : i32
    %c0_i32_1 = arith.constant 0 : i32
    return %c0_i32, %c0_i32_0 : i32, i32
  }
  func.func @transform_5(%arg0: i32) -> (i32, i32) {
    %c0_i32 = arith.constant 0 : i32
    %c0_i32_0 = arith.constant 0 : i32
    %c0_i32_1 = arith.constant 0 : i32
    return %c0_i32, %c0_i32_0 : i32, i32
  }
  func.func @transform_6(%arg0: i32) -> (i32, i32) {
    %c0_i32 = arith.constant 0 : i32
    %c0_i32_0 = arith.constant 0 : i32
    %c0_i32_1 = arith.constant 0 : i32
    return %c0_i32, %c0_i32_0 : i32, i32
  }
  func.func @transform_7(%arg0: i32) -> (i32, i32) {
    %c0_i32 = arith.constant 0 : i32
    %c0_i32_0 = arith.constant 0 : i32
    %c0_i32_1 = arith.constant 0 : i32
    return %c0_i32, %c0_i32_0 : i32, i32
  }
  func.func @transform_8(%arg0: i32) -> (i32, i32) {
    %c0_i32 = arith.constant 0 : i32
    %c0_i32_0 = arith.constant 0 : i32
    %c0_i32_1 = arith.constant 0 : i32
    return %c0_i32, %c0_i32_0 : i32, i32
  }
  func.func @transform_9(%arg0: i32) -> (i32, i32, i32) {
    %c0_i32 = arith.constant 0 : i32
    %c0_i32_0 = arith.constant 0 : i32
    %c0_i32_1 = arith.constant 0 : i32
    return %arg0, %c0_i32, %c0_i32_0 : i32, i32, i32
  }
}

</mosaic_0001>

<llo_original>
// kernel: conv_block_forward.1
$region0: #{conv_block_forward.1}
  #allocation0 [shape = 'u32[]', space=smem, size = 0x4, offset = 0x4, fixed_abs, tag = 'smem constant byte address 0x4 - core index']
  #allocation1 [shape = 'u32[144,128]{1,0:T(1,128)}', space=vmem, size = 0x12000, scoped, tag = 'internal scratch']
  #allocation2 [shape = 'bf16[16,512]{1,0:T(16,128)(2,1)}', space=vmem, size = 0x4000, scoped, tag = 'scratch operand']
  #allocation3 [shape = 'bf16[144,256]{1,0:T(16,128)(2,1)}', space=vmem, size = 0x12000, scoped, tag = 'scratch operand']
  %s0 = inlined_call_operand.vmem [shape: bf16[2,4,256], index: 0, kind: input, shape index: {}]
  %s1 = inlined_call_operand.vmem [shape: bf16[3,256], index: 1, kind: input, shape index: {}]
  %s2 = inlined_call_operand.vmem [shape: f32[1,256], index: 2, kind: input, shape index: {}]
  %s3 = inlined_call_operand.vmem [shape: bf16[16,4], index: 3, kind: input, shape index: {}]
  %s4 = inlined_call_operand.vmem [shape: f32[16,1], index: 4, kind: input, shape index: {}]
  %s5 = inlined_call_operand.vmem [shape: bf16[16,144], index: 5, kind: input, shape index: {}]
  %s6 = inlined_call_operand.vmem [shape: f32[16,1], index: 6, kind: input, shape index: {}]
  %s7 = inlined_call_operand.vmem [shape: bf16[8,16], index: 7, kind: input, shape index: {}]
  %s8 = inlined_call_operand.vmem [shape: f32[8,1], index: 8, kind: input, shape index: {}]
  %s9 = inlined_call_operand.vmem [shape: f32[2,8,256], index: 9, kind: output, shape index: {}]
  %s10 = sld [smem:[#allocation0]]
  $region69: #{conv_block_forward.1} parent=0
    _
  %s12 = ssub.s32 1, %s10
  %s13 = scalar_select 0, %s12, %s10
  loop: start=0, step=1, limit=4
  $region2: #{conv_block_forward.1} parent=0 // loop_pre_header
    _
  $region3: #{conv_block_forward.1} parent=0 // loop_header
    %s15 = sphi 0, %s19
    %p16 = scmp.ge.s32.totalorder %s15, 4
    %s25 = sphi 0, %s27
    %s28 = sphi 0, %s25
    %s29 = sphi 0, %s28
    %s45 = sphi 0, %s29
    %s49 = sphi 0, %s49
    %s51 = sphi 0, %s49
    %s52 = sphi 0, %s51
    %s66 = sphi 0, %s52
    %s70 = sphi 0, %s70
    %s72 = sphi 0, %s70
    %s73 = sphi 0, %s72
    %s87 = sphi 0, %s73
    %s91 = sphi 0, %s91
    %s93 = sphi 0, %s91
    %s94 = sphi 0, %s93
    %s108 = sphi 0, %s94
    %s112 = sphi 0, %s112
    %s114 = sphi 0, %s112
    %s115 = sphi 0, %s114
    %s129 = sphi 0, %s115
    %s133 = sphi 0, %s133
    %s135 = sphi 0, %s133
    %s136 = sphi 0, %s135
    %s150 = sphi 0, %s136
    %s154 = sphi 0, %s154
    %s156 = sphi 0, %s154
    %s157 = sphi 0, %s156
    %s171 = sphi 0, %s157
    %s175 = sphi 0, %s175
    %s177 = sphi 0, %s175
    %s178 = sphi 0, %s177
    %s192 = sphi 0, %s178
    %s196 = sphi 0, %s196
    %s198 = sphi 0, %s196
    %s199 = sphi 0, %s198
    %s213 = sphi 0, %s199
    %s219 = sphi 0, %s221
    %s222 = sphi 0, %s219
    %s223 = sphi 0, %s222
    %s239 = sphi 0, %s223
  $region4: #{conv_block_forward.1} parent=0 // loop_header_branch
    %18 = sbr.rel (%p16) target = $region8
  $region5: #{conv_block_forward.1} parent=0 // loop_body
    %s20 = ssub.s32 %s15, 1
    %s21 = ssub.s32 %s15, 2
    %s22 = sadd.s32 %s15, 1
    %s23 = ssub.s32 %s15, %s22
    %p24 = scmp.eq.s32.totalorder %s23, 0
    %s26 = sadd.s32 %s25, 1
    %s27 = scalar_select %p24, %s25, %s26
    %p30 = pneg %p24
    %p31 = scmp.eq.s32.totalorder %s15, 1
    %p32 = por %p30, %p31
    %p33 = scmp.ne.s32.totalorder %s25, %s28
    %p34 = scmp.eq.s32.totalorder %s15, 0
    %p35 = por %p33, %p34
    %p36 = scmp.ne.s32.totalorder %s25, %s28
    %p37 = scmp.eq.s32.totalorder %s20, 1
    %p38 = por %p36, %p37
    %p39 = scmp.ne.s32.totalorder %s28, %s29
    %p40 = scmp.eq.s32.totalorder %s20, 0
    %p41 = por %p39, %p40
    %p42 = scmp.ne.s32.totalorder %s28, %s29
    %p43 = scmp.eq.s32.totalorder %s21, 1
    %p44 = por %p42, %p43
    %p46 = scmp.ne.s32.totalorder %s29, %s45
    %p47 = scmp.eq.s32.totalorder %s21, 0
    %p48 = por %p46, %p47
    %s50 = sadd.s32 %s49, 1
    %p53 = scmp.eq.s32.totalorder %s15, 1
    %p54 = scmp.ne.s32.totalorder %s49, %s51
    %p55 = scmp.eq.s32.totalorder %s15, 0
    %p56 = por %p54, %p55
    %p57 = scmp.ne.s32.totalorder %s49, %s51
    %p58 = scmp.eq.s32.totalorder %s20, 1
    %p59 = por %p57, %p58
    %p60 = scmp.ne.s32.totalorder %s51, %s52
    %p61 = scmp.eq.s32.totalorder %s20, 0
    %p62 = por %p60, %p61
    %p63 = scmp.ne.s32.totalorder %s51, %s52
    %p64 = scmp.eq.s32.totalorder %s21, 1
    %p65 = por %p63, %p64
    %p67 = scmp.ne.s32.totalorder %s52, %s66
    %p68 = scmp.eq.s32.totalorder %s21, 0
    %p69 = por %p67, %p68
    %s71 = sadd.s32 %s70, 1
    %p74 = scmp.eq.s32.totalorder %s15, 1
    %p75 = scmp.ne.s32.totalorder %s70, %s72
    %p76 = scmp.eq.s32.totalorder %s15, 0
    %p77 = por %p75, %p76
    %p78 = scmp.ne.s32.totalorder %s70, %s72
    %p79 = scmp.eq.s32.totalorder %s20, 1
    %p80 = por %p78, %p79
    %p81 = scmp.ne.s32.totalorder %s72, %s73
    %p82 = scmp.eq.s32.totalorder %s20, 0
    %p83 = por %p81, %p82
    %p84 = scmp.ne.s32.totalorder %s72, %s73
    %p85 = scmp.eq.s32.totalorder %s21, 1
    %p86 = por %p84, %p85
    %p88 = scmp.ne.s32.totalorder %s73, %s87
    %p89 = scmp.eq.s32.totalorder %s21, 0
    %p90 = por %p88, %p89
    %s92 = sadd.s32 %s91, 1
    %p95 = scmp.eq.s32.totalorder %s15, 1
    %p96 = scmp.ne.s32.totalorder %s91, %s93
    %p97 = scmp.eq.s32.totalorder %s15, 0
    %p98 = por %p96, %p97
    %p99 = scmp.ne.s32.totalorder %s91, %s93
    %p100 = scmp.eq.s32.totalorder %s20, 1
    %p101 = por %p99, %p100
    %p102 = scmp.ne.s32.totalorder %s93, %s94
    %p103 = scmp.eq.s32.totalorder %s20, 0
    %p104 = por %p102, %p103
    %p105 = scmp.ne.s32.totalorder %s93, %s94
    %p106 = scmp.eq.s32.totalorder %s21, 1
    %p107 = por %p105, %p106
    %p109 = scmp.ne.s32.totalorder %s94, %s108
    %p110 = scmp.eq.s32.totalorder %s21, 0
    %p111 = por %p109, %p110
    %s113 = sadd.s32 %s112, 1
    %p116 = scmp.eq.s32.totalorder %s15, 1
    %p117 = scmp.ne.s32.totalorder %s112, %s114
    %p118 = scmp.eq.s32.totalorder %s15, 0
    %p119 = por %p117, %p118
    %p120 = scmp.ne.s32.totalorder %s112, %s114
    %p121 = scmp.eq.s32.totalorder %s20, 1
    %p122 = por %p120, %p121
    %p123 = scmp.ne.s32.totalorder %s114, %s115
    %p124 = scmp.eq.s32.totalorder %s20, 0
    %p125 = por %p123, %p124
    %p126 = scmp.ne.s32.totalorder %s114, %s115
    %p127 = scmp.eq.s32.totalorder %s21, 1
    %p128 = por %p126, %p127
    %p130 = scmp.ne.s32.totalorder %s115, %s129
    %p131 = scmp.eq.s32.totalorder %s21, 0
    %p132 = por %p130, %p131
    %s134 = sadd.s32 %s133, 1
    %p137 = scmp.eq.s32.totalorder %s15, 1
    %p138 = scmp.ne.s32.totalorder %s133, %s135
    %p139 = scmp.eq.s32.totalorder %s15, 0
    %p140 = por %p138, %p139
    %p141 = scmp.ne.s32.totalorder %s133, %s135
    %p142 = scmp.eq.s32.totalorder %s20, 1
    %p143 = por %p141, %p142
    %p144 = scmp.ne.s32.totalorder %s135, %s136
    %p145 = scmp.eq.s32.totalorder %s20, 0
    %p146 = por %p144, %p145
    %p147 = scmp.ne.s32.totalorder %s135, %s136
    %p148 = scmp.eq.s32.totalorder %s21, 1
    %p149 = por %p147, %p148
    %p151 = scmp.ne.s32.totalorder %s136, %s150
    %p152 = scmp.eq.s32.totalorder %s21, 0
    %p153 = por %p151, %p152
    %s155 = sadd.s32 %s154, 1
    %p158 = scmp.eq.s32.totalorder %s15, 1
    %p159 = scmp.ne.s32.totalorder %s154, %s156
    %p160 = scmp.eq.s32.totalorder %s15, 0
    %p161 = por %p159, %p160
    %p162 = scmp.ne.s32.totalorder %s154, %s156
    %p163 = scmp.eq.s32.totalorder %s20, 1
    %p164 = por %p162, %p163
    %p165 = scmp.ne.s32.totalorder %s156, %s157
    %p166 = scmp.eq.s32.totalorder %s20, 0
    %p167 = por %p165, %p166
    %p168 = scmp.ne.s32.totalorder %s156, %s157
    %p169 = scmp.eq.s32.totalorder %s21, 1
    %p170 = por %p168, %p169
    %p172 = scmp.ne.s32.totalorder %s157, %s171
    %p173 = scmp.eq.s32.totalorder %s21, 0
    %p174 = por %p172, %p173
    %s176 = sadd.s32 %s175, 1
    %p179 = scmp.eq.s32.totalorder %s15, 1
    %p180 = scmp.ne.s32.totalorder %s175, %s177
    %p181 = scmp.eq.s32.totalorder %s15, 0
    %p182 = por %p180, %p181
    %p183 = scmp.ne.s32.totalorder %s175, %s177
    %p184 = scmp.eq.s32.totalorder %s20, 1
    %p185 = por %p183, %p184
    %p186 = scmp.ne.s32.totalorder %s177, %s178
    %p187 = scmp.eq.s32.totalorder %s20, 0
    %p188 = por %p186, %p187
    %p189 = scmp.ne.s32.totalorder %s177, %s178
    %p190 = scmp.eq.s32.totalorder %s21, 1
    %p191 = por %p189, %p190
    %p193 = scmp.ne.s32.totalorder %s178, %s192
    %p194 = scmp.eq.s32.totalorder %s21, 0
    %p195 = por %p193, %p194
    %s197 = sadd.s32 %s196, 1
    %p200 = scmp.eq.s32.totalorder %s15, 1
    %p201 = scmp.ne.s32.totalorder %s196, %s198
    %p202 = scmp.eq.s32.totalorder %s15, 0
    %p203 = por %p201, %p202
    %p204 = scmp.ne.s32.totalorder %s196, %s198
    %p205 = scmp.eq.s32.totalorder %s20, 1
    %p206 = por %p204, %p205
    %p207 = scmp.ne.s32.totalorder %s198, %s199
    %p208 = scmp.eq.s32.totalorder %s20, 0
    %p209 = por %p207, %p208
    %p210 = scmp.ne.s32.totalorder %s198, %s199
    %p211 = scmp.eq.s32.totalorder %s21, 1
    %p212 = por %p210, %p211
    %p214 = scmp.ne.s32.totalorder %s199, %s213
    %p215 = scmp.eq.s32.totalorder %s21, 0
    %p216 = por %p214, %p215
    %s217 = ssub.s32 %s15, %s22
    %p218 = scmp.eq.s32.totalorder %s217, 0
    %s220 = sadd.s32 %s219, 1
    %s221 = scalar_select %p218, %s219, %s220
    %p224 = pneg %p218
    %p225 = scmp.eq.s32.totalorder %s15, 1
    %p226 = por %p224, %p225
    %p227 = scmp.ne.s32.totalorder %s219, %s222
    %p228 = scmp.eq.s32.totalorder %s15, 0
    %p229 = por %p227, %p228
    %p230 = scmp.ne.s32.totalorder %s219, %s222
    %p231 = scmp.eq.s32.totalorder %s20, 1
    %p232 = por %p230, %p231
    %p233 = scmp.ne.s32.totalorder %s222, %s223
    %p234 = scmp.eq.s32.totalorder %s20, 0
    %p235 = por %p233, %p234
    %p236 = scmp.ne.s32.totalorder %s222, %s223
    %p237 = scmp.eq.s32.totalorder %s21, 1
    %p238 = por %p236, %p237
    %p240 = scmp.ne.s32.totalorder %s223, %s239
    %p241 = scmp.eq.s32.totalorder %s21, 0
    %p242 = por %p240, %p241
    %p243 = scmp.le.s32.totalorder 1, %s15
    %p244 = scmp.lt.s32.totalorder %s15, 3
    %p245 = pnand %p243, %p244
    %p246 = pneg %p245
    // Predicated region
    $region9: #{conv_block_forward.1} parent=5 // pred_check
      _
    $region10: #{conv_block_forward.1} parent=5 // pred_check_branch
      %248 = sbr.rel (%p245) target = $region12
    $region11: #{conv_block_forward.1} parent=5 // pred_region
      %s249 = ssub.s32 %s15, 1
      // Predicated region
      $region13: #{conv_block_forward.1} parent=11 // pred_check
        %p250 = pneg %p62
      $region14: #{conv_block_forward.1} parent=11 // pred_check_branch
        %252 = sbr.rel (%p250) target = $region16
      $region15: #{conv_block_forward.1} parent=11 // pred_region
        _
      $region16: #{conv_block_forward.1} parent=11 // pred_fallthru
        _
      // Predicated region
      $region17: #{conv_block_forward.1} parent=11 // pred_check
        %p253 = pneg %p83
      $region18: #{conv_block_forward.1} parent=11 // pred_check_branch
        %255 = sbr.rel (%p253) target = $region20
      $region19: #{conv_block_forward.1} parent=11 // pred_region
        _
      $region20: #{conv_block_forward.1} parent=11 // pred_fallthru
        _
      // Predicated region
      $region21: #{conv_block_forward.1} parent=11 // pred_check
        %p256 = pneg %p104
      $region22: #{conv_block_forward.1} parent=11 // pred_check_branch
        %258 = sbr.rel (%p256) target = $region24
      $region23: #{conv_block_forward.1} parent=11 // pred_region
        _
      $region24: #{conv_block_forward.1} parent=11 // pred_fallthru
        _
      // Predicated region
      $region25: #{conv_block_forward.1} parent=11 // pred_check
        %p259 = pneg %p125
      $region26: #{conv_block_forward.1} parent=11 // pred_check_branch
        %261 = sbr.rel (%p259) target = $region28
      $region27: #{conv_block_forward.1} parent=11 // pred_region
        _
      $region28: #{conv_block_forward.1} parent=11 // pred_fallthru
        _
      // Predicated region
      $region29: #{conv_block_forward.1} parent=11 // pred_check
        %p262 = pneg %p146
      $region30: #{conv_block_forward.1} parent=11 // pred_check_branch
        %264 = sbr.rel (%p262) target = $region32
      $region31: #{conv_block_forward.1} parent=11 // pred_region
        _
      $region32: #{conv_block_forward.1} parent=11 // pred_fallthru
        _
      // Predicated region
      $region33: #{conv_block_forward.1} parent=11 // pred_check
        %p265 = pneg %p167
      $region34: #{conv_block_forward.1} parent=11 // pred_check_branch
        %267 = sbr.rel (%p265) target = $region36
      $region35: #{conv_block_forward.1} parent=11 // pred_region
        _
      $region36: #{conv_block_forward.1} parent=11 // pred_fallthru
        _
      // Predicated region
      $region37: #{conv_block_forward.1} parent=11 // pred_check
        %p268 = pneg %p188
      $region38: #{conv_block_forward.1} parent=11 // pred_check_branch
        %270 = sbr.rel (%p268) target = $region40
      $region39: #{conv_block_forward.1} parent=11 // pred_region
        _
      $region40: #{conv_block_forward.1} parent=11 // pred_fallthru
        _
      // Predicated region
      $region41: #{conv_block_forward.1} parent=11 // pred_check
        %p271 = pneg %p209
      $region42: #{conv_block_forward.1} parent=11 // pred_check_branch
        %273 = sbr.rel (%p271) target = $region44
      $region43: #{conv_block_forward.1} parent=11 // pred_region
        _
      $region44: #{conv_block_forward.1} parent=11 // pred_fallthru
        _
    $region12: #{conv_block_forward.1} parent=5 // pred_fallthru
      _
    %p274 = scmp.lt.s32.totalorder %s15, 2
    // Predicated region
    $region45: #{conv_block_forward.1} parent=5 // pred_check
      %p275 = pneg %p274
    $region46: #{conv_block_forward.1} parent=5 // pred_check_branch
      %277 = sbr.rel (%p275) target = $region48
    $region47: #{conv_block_forward.1} parent=5 // pred_region
      // Predicated region
      $region49: #{conv_block_forward.1} parent=47 // pred_check
        %p278 = pneg %p35
      $region50: #{conv_block_forward.1} parent=47 // pred_check_branch
        %280 = sbr.rel (%p278) target = $region52
      $region51: #{conv_block_forward.1} parent=47 // pred_region
        %p281 = scmp.lt.s32.totalorder %s15, 1
        %s282 = scalar_select %p281, %s15, 1
        %s283 = smul.addr %s282, 2
        %s284 = smul.addr %s283, 2
        %s285 = scalar_lea.vmem %s0, %s284
      $region52: #{conv_block_forward.1} parent=47 // pred_fallthru
        _
    $region48: #{conv_block_forward.1} parent=5 // pred_fallthru
      _
    %p286 = scmp.le.s32.totalorder 1, %s15
    %p287 = scmp.lt.s32.totalorder %s15, 3
    %p288 = pnand %p286, %p287
    %p289 = pneg %p288
    // Predicated region
    $region53: #{conv_block_forward.1} parent=5 // pred_check
      _
    $region54: #{conv_block_forward.1} parent=5 // pred_check_branch
      %291 = sbr.rel (%p288) target = $region56
    $region55: #{conv_block_forward.1} parent=5 // pred_region
      %s292 = ssub.s32 %s15, 1
      %p293 = scmp.lt.s32.totalorder %s20, 1
      %s294 = scalar_select %p293, %s20, 1
      %s295 = smul.addr %s294, 2
      %s296 = smul.addr %s295, 2
      %s297 = scalar_lea.vmem %s0, %s296
      %p298 = pneg %p41
      %p299 = pneg %p38
      %p300 = pneg %p62
      %p301 = pneg %p59
      %p302 = pneg %p83
      %p303 = pneg %p80
      %p304 = pneg %p104
      %p305 = pneg %p101
      %p306 = pneg %p125
      %p307 = pneg %p122
      %p308 = pneg %p146
      %p309 = pneg %p143
      %p310 = pneg %p167
      %p311 = pneg %p164
      %p312 = pneg %p188
      %p313 = pneg %p185
      %p314 = pneg %p209
      %p315 = pneg %p206
      %p316 = pneg %p235
      %p317 = pneg %p232
      %p318 = scmp.lt.s32.totalorder %s20, 1
      %s319 = scalar_select %p318, %s20, 1
      %s320 = smul.addr %s319, 2
      %s321 = smul.addr %s320, 8
      %s322 = scalar_lea.vmem %s9, %s321
      %p323 = scmp.lt.s32.totalorder %s20, 1
      %s324 = scalar_select %p323, %s20, 1
      %s325 = smul.addr %s324, 2
      %s326 = smul.addr %s325, 2
      %s327 = scalar_lea.vmem %s0, %s326
      %p328 = scmp.lt.s32.totalorder %s20, 1
      %s329 = scalar_select %p328, %s20, 1
      %s330 = smul.addr %s329, 2
      %s331 = smul.addr %s330, 8
      %s332 = scalar_lea.vmem %s9, %s331
      %v334 = vld [vmem:[%s3] sm:$0xf]
      %v335 = vld [vmem:[%s3 + $0x4] sm:$0xf]
      %v336 = vld [vmem:[%s327] sm:$0xf]
      %v337 = vld [vmem:[%s4] sm:$0xff]
      %v338 = vld [vmem:[%s4 + $0x8] sm:$0xff]
      %340 = vset.pattern.permute.xlu0 0
      %341 = vperm.xlu0 %340, %v337
      %v342 = vpop.permute.xlu0 %341
      %345 = vset.pattern.permute.xlu0 0
      %346 = vperm.xlu0 %345, %v338
      %v347 = vpop.permute.xlu0 %346
      %v351 = vunpack.c.l.b16 %v334
      %v352 = vunpack.c.l.b16 %v335
      %v353 = vpack.c.b16 %v352, %v351
      %v356 = vunpack.c.l.s4 1983009808
      %v357 = vunpack.c.0.s8 %v356
      %v358 = vlaneseq
      %v359 = vshrl.u32 %v358, 7
      %v360 = vsub.s32 %v357, %v359
      %v361 = vrot.slane %v336, %v360
      %v362 = vcombine.high %v361, %v361
      %vm363 = vcmask 31744
      %v365 = vsel %vm363, %v353, 0
      %vm367 = vcmask 1041408
      %v369 = vsel %vm367, %v361, 0
      %v372 = vsel %vm367, %v362, 0
      %374 = vmatprep.subr.bf16.mxu0 %v372
      %375 = vmatpush1.bf16.msra.mxu0 %v369
      %376 = vmatprep.subr.bf16.mxu0 0
      %377 = vmatpush1.bf16.msra.mxu0 0
      %378 = vmatprep.subr.bf16.mxu0 0
      %379 = vmatpush1.bf16.msra.mxu0 0
      %380 = vmatprep.subr.bf16.mxu0 0
      %381 = vmatpush1.bf16.msra.mxu0 0
      %382 = vmatprep.subr.bf16.mxu0 0
      %383 = vmatpush1.bf16.msra.mxu0 0
      %384 = vmatprep.subr.bf16.mxu0 0
      %385 = vmatpush1.bf16.msra.mxu0 0
      %386 = vmatprep.subr.bf16.mxu0 0
      %387 = vmatpush1.bf16.msra.mxu0 0
      %388 = vmatprep.subr.bf16.mxu0 0
      %389 = vmatpush1.bf16.msra.mxu0 0
      %390 = vmatprep.subr.bf16.mxu0 0
      %391 = vmatpush1.bf16.msra.mxu0 0
      %392 = vmatprep.subr.bf16.mxu0 0
      %393 = vmatpush1.bf16.msra.mxu0 0
      %394 = vmatprep.subr.bf16.mxu0 0
      %395 = vmatpush1.bf16.msra.mxu0 0
      %396 = vmatprep.subr.bf16.mxu0 0
      %397 = vmatpush1.bf16.msra.mxu0 0
      %398 = vmatprep.subr.bf16.mxu0 0
      %399 = vmatpush1.bf16.msra.mxu0 0
      %400 = vmatprep.subr.bf16.mxu0 0
      %401 = vmatpush1.bf16.msra.mxu0 0
      %402 = vmatprep.subr.bf16.mxu0 0
      %403 = vmatpush1.bf16.msra.mxu0 0
      %404 = vmatprep.subr.bf16.mxu0 0
      %405 = vmatpush1.bf16.msra.mxu0 0
      %406 = vmatprep.mubr.bf16.mxu0 0
      %407 = vmatmul.mubr.bf16.gmra.mrb[0].mxu0 %v365
      %v408 = vpop.f32.mrb[0].mxu0
      %v409 = vadd.f32 %v342, %v408
      %v410 = vpop.f32.mrb[0].mxu0
      %v411 = vadd.f32 %v342, %v410
      %v412 = vpop.f32.mrb[0].mxu0
      %v413 = vadd.f32 %v347, %v412
      %v414 = vpop.f32.mrb[0].mxu0
      %v415 = vadd.f32 %v347, %v414
      %416 = vdwg.mxu0
      %v417 = vmax.f32 %v409, 0.0
      %v418 = vmax.f32 %v411, 0.0
      %v419 = vmax.f32 %v413, 0.0
      %v420 = vmax.f32 %v415, 0.0
      %421 = vst [vmem:[#allocation2] sm:$0xff] 0
      %422 = vst [vmem:[#allocation2 + $0x18] sm:$0xff] 0
      %v423 = vpack.c.bf16 %v419, %v417
      %v424 = vpack.c.bf16 %v420, %v418
      %425 = vst [vmem:[#allocation2 + $0x8] sm:$0xff] %v423
      %426 = vst [vmem:[#allocation2 + $0x10] sm:$0xff] %v424
      %v427 = vld [vmem:[#allocation2] sm:$0xff]
      %v428 = vld [vmem:[#allocation2 + $0x8] sm:$0xff]
      %v429 = vld [vmem:[#allocation2 + $0x10] sm:$0xff]
      %v430 = vld [vmem:[%s1] sm:$0x5]
      %v433 = vunpack.c.l.s4 1983009808
      %v434 = vunpack.c.0.s8 %v433
      %v435 = vlaneseq
      %v436 = vshrl.u32 %v435, 7
      %v437 = vsub.s32 %v434, %v436
      %v438 = vrot.slane %v430, %v437
      %v439 = vcombine.high %v438, %v438
      %v441 = vpack.i.b16 %v438, %v438
      %v443 = vlaneseq
      %v444 = vshrl.u32 %v443, 7
      %v445 = vsub.s32 0, %v444
      %v446 = vrot.slane %v441, %v445
      %v448 = vpack.i.b16 %v439, %v439
      %v450 = vlaneseq
      %v451 = vshrl.u32 %v450, 7
      %v452 = vsub.s32 0, %v451
      %v453 = vrot.slane %v448, %v452
      %456 = vrot.lane.b32.xlu0 %v446, 111
      %v457 = vpop.permute.xlu0 %456
      %458 = vrot.lane.b32.xlu0 %v453, 111
      %v459 = vpop.permute.xlu0 %458
      %vm460 = vcmask 908288
      %v461 = vsel %vm460, %v457, %v459
      %v465 = vmul.bf16 %v427, %v457
      %v466 = vmul.bf16 %v428, %v461
      %v467 = vmul.bf16 %v429, %v459
      %471 = vrot.lane.b32.xlu0 %v465, 17
      %v472 = vpop.permute.xlu0 %471
      %473 = vrot.lane.b32.xlu0 %v466, 17
      %v474 = vpop.permute.xlu0 %473
      %475 = vrot.lane.b32.xlu0 %v467, 17
      %v476 = vpop.permute.xlu0 %475
      %vm477 = vcmask 138240
      %v478 = vsel %vm477, %v472, %v474
      %v479 = vsel %vm477, %v474, %v476
      %482 = vst [vmem:[#allocation3] sm:$0xff] %v478
      %483 = vst [vmem:[#allocation3 + $0x8] sm:$0xff] %v479
      %v484 = vld [vmem:[#allocation2] sm:$0xff]
      %v485 = vld [vmem:[#allocation2 + $0x8] sm:$0xff]
      %v486 = vld [vmem:[#allocation2 + $0x10] sm:$0xff]
      %490 = vrot.lane.b32.xlu0 %v484, 16
      %v491 = vpop.permute.xlu0 %490
      %492 = vrot.lane.b32.xlu0 %v485, 16
      %v493 = vpop.permute.xlu0 %492
      %494 = vrot.lane.b32.xlu0 %v486, 16
      %v495 = vpop.permute.xlu0 %494
      %vm496 = vcmask 130048
      %v497 = vsel %vm496, %v491, %v493
      %v498 = vsel %vm496, %v493, %v495
      %501 = vst [vmem:[#allocation3 + $0x10] sm:$0xff] %v497
      %502 = vst [vmem:[#allocation3 + $0x18] sm:$0xff] %v498
      %v503 = vld [vmem:[#allocation2] sm:$0xff]
      %v504 = vld [vmem:[#allocation2 + $0x8] sm:$0xff]
      %v505 = vld [vmem:[#allocation2 + $0x10] sm:$0xff]
      %v506 = vld [vmem:[%s1] sm:$0xa]
      %v509 = vunpack.c.l.s4 1983009808
      %v510 = vunpack.c.0.s8 %v509
      %v511 = vlaneseq
      %v512 = vshrl.u32 %v511, 7
      %v513 = vsub.s32 %v510, %v512
      %v514 = vrot.slane %v506, %v513
      %v515 = vcombine.high %v514, %v514
      %v517 = vpack.i.b16 %v514, %v514
      %v519 = vlaneseq
      %v520 = vshrl.u32 %v519, 7
      %v521 = vsub.s32 1, %v520
      %v522 = vrot.slane %v517, %v521
      %v524 = vpack.i.b16 %v515, %v515
      %v526 = vlaneseq
      %v527 = vshrl.u32 %v526, 7
      %v528 = vsub.s32 1, %v527
      %v529 = vrot.slane %v524, %v528
      %532 = vrot.lane.b32.xlu0 %v522, 113
      %v533 = vpop.permute.xlu0 %532
      %534 = vrot.lane.b32.xlu0 %v529, 113
      %v535 = vpop.permute.xlu0 %534
      %vm536 = vcmask 924672
      %v537 = vsel %vm536, %v533, %v535
      %v541 = vmul.bf16 %v503, %v533
      %v542 = vmul.bf16 %v504, %v537
      %v543 = vmul.bf16 %v505, %v535
      %547 = vrot.lane.b32.xlu0 %v541, 15
      %v548 = vpop.permute.xlu0 %547
      %549 = vrot.lane.b32.xlu0 %v542, 15
      %v550 = vpop.permute.xlu0 %549
      %551 = vrot.lane.b32.xlu0 %v543, 15
      %v552 = vpop.permute.xlu0 %551
      %vm553 = vcmask 121856
      %v554 = vsel %vm553, %v548, %v550
      %v555 = vsel %vm553, %v550, %v552
      %558 = vst [vmem:[#allocation3 + $0x20] sm:$0xff] %v554
      %559 = vst [vmem:[#allocation3 + $0x28] sm:$0xff] %v555
      %v560 = vld [vmem:[#allocation2] sm:$0xff]
      %v561 = vld [vmem:[#allocation2 + $0x8] sm:$0xff]
      %v562 = vld [vmem:[#allocation2 + $0x10] sm:$0xff]
      %v563 = vld [vmem:[%s1] sm:$0x5]
      %v566 = vunpack.c.l.s4 1983009808
      %v567 = vunpack.c.0.s8 %v566
      %v568 = vlaneseq
      %v569 = vshrl.u32 %v568, 7
      %v570 = vsub.s32 %v567, %v569
      %v571 = vrot.slane %v563, %v570
      %v572 = vcombine.high %v571, %v571
      %v574 = vpack.i.b16 %v571, %v571
      %v576 = vlaneseq
      %v577 = vshrl.u32 %v576, 7
      %v578 = vsub.s32 0, %v577
      %v579 = vrot.slane %v574, %v578
      %v581 = vpack.i.b16 %v572, %v572
      %v583 = vlaneseq
      %v584 = vshrl.u32 %v583, 7
      %v585 = vsub.s32 0, %v584
      %v586 = vrot.slane %v581, %v585
      %589 = vrot.lane.b32.xlu0 %v579, 127
      %v590 = vpop.permute.xlu0 %589
      %591 = vrot.lane.b32.xlu0 %v586, 127
      %v592 = vpop.permute.xlu0 %591
      %vm593 = vcmask 1039360
      %v594 = vsel %vm593, %v590, %v592
      %v598 = vmul.bf16 %v560, %v590
      %v599 = vmul.bf16 %v561, %v594
      %v600 = vmul.bf16 %v562, %v592
      %604 = vrot.lane.b32.xlu0 %v598, 1
      %v605 = vpop.permute.xlu0 %604
      %606 = vrot.lane.b32.xlu0 %v599, 1
      %v607 = vpop.permute.xlu0 %606
      %608 = vrot.lane.b32.xlu0 %v600, 1
      %v609 = vpop.permute.xlu0 %608
      %vm610 = vcmask 7168
      %v611 = vsel %vm610, %v605, %v607
      %v612 = vsel %vm610, %v607, %v609
      %615 = vst [vmem:[#allocation3 + $0x30] sm:$0xff] %v611
      %616 = vst [vmem:[#allocation3 + $0x38] sm:$0xff] %v612
      %v617 = vld [vmem:[#allocation2 + $0x8] sm:$0xff]
      %v618 = vld [vmem:[#allocation2 + $0x10] sm:$0xff]
      %619 = vst [vmem:[#allocation3 + $0x40] sm:$0xff] %v617
      %620 = vst [vmem:[#allocation3 + $0x48] sm:$0xff] %v618
      %v621 = vld [vmem:[#allocation2 + $0x8] sm:$0xff]
      %v622 = vld [vmem:[#allocation2 + $0x10] sm:$0xff]
      %v623 = vld [vmem:[#allocation2 + $0x18] sm:$0xff]
      %v624 = vld [vmem:[%s1] sm:$0xa]
      %v627 = vunpack.c.l.s4 1983009808
      %v628 = vunpack.c.0.s8 %v627
      %v629 = vlaneseq
      %v630 = vshrl.u32 %v629, 7
      %v631 = vsub.s32 %v628, %v630
      %v632 = vrot.slane %v624, %v631
      %v633 = vcombine.high %v632, %v632
      %v635 = vpack.i.b16 %v632, %v632
      %v637 = vlaneseq
      %v638 = vshrl.u32 %v637, 7
      %v639 = vsub.s32 1, %v638
      %v640 = vrot.slane %v635, %v639
      %v642 = vpack.i.b16 %v633, %v633
      %v644 = vlaneseq
      %v645 = vshrl.u32 %v644, 7
      %v646 = vsub.s32 1, %v645
      %v647 = vrot.slane %v642, %v646
      %650 = vrot.lane.b32.xlu0 %v640, 1
      %v651 = vpop.permute.xlu0 %650
      %652 = vrot.lane.b32.xlu0 %v647, 1
      %v653 = vpop.permute.xlu0 %652
      %v654 = vsel %vm610, %v651, %v653
      %v658 = vmul.bf16 %v621, %v651
      %v659 = vmul.bf16 %v622, %v654
      %v660 = vmul.bf16 %v623, %v653
      %664 = vrot.lane.b32.xlu0 %v658, 127
      %v665 = vpop.permute.xlu0 %664
      %666 = vrot.lane.b32.xlu0 %v659, 127
      %v667 = vpop.permute.xlu0 %666
      %668 = vrot.lane.b32.xlu0 %v660, 127
      %v669 = vpop.permute.xlu0 %668
      %v670 = vsel %vm593, %v665, %v667
      %v671 = vsel %vm593, %v667, %v669
      %674 = vst [vmem:[#allocation3 + $0x50] sm:$0xff] %v670
      %675 = vst [vmem:[#allocation3 + $0x58] sm:$0xff] %v671
      %v676 = vld [vmem:[#allocation2 + $0x8] sm:$0xff]
      %v677 = vld [vmem:[#allocation2 + $0x10] sm:$0xff]
      %v678 = vld [vmem:[#allocation2 + $0x18] sm:$0xff]
      %v679 = vld [vmem:[%s1] sm:$0x5]
      %v682 = vunpack.c.l.s4 1983009808
      %v683 = vunpack.c.0.s8 %v682
      %v684 = vlaneseq
      %v685 = vshrl.u32 %v684, 7
      %v686 = vsub.s32 %v683, %v685
      %v687 = vrot.slane %v679, %v686
      %v688 = vcombine.high %v687, %v687
      %v690 = vpack.i.b16 %v687, %v687
      %v692 = vlaneseq
      %v693 = vshrl.u32 %v692, 7
      %v694 = vsub.s32 0, %v693
      %v695 = vrot.slane %v690, %v694
      %v697 = vpack.i.b16 %v688, %v688
      %v699 = vlaneseq
      %v700 = vshrl.u32 %v699, 7
      %v701 = vsub.s32 0, %v700
      %v702 = vrot.slane %v697, %v701
      %705 = vrot.lane.b32.xlu0 %v695, 15
      %v706 = vpop.permute.xlu0 %705
      %707 = vrot.lane.b32.xlu0 %v702, 15
      %v708 = vpop.permute.xlu0 %707
      %v709 = vsel %vm553, %v706, %v708
      %v713 = vmul.bf16 %v676, %v706
      %v714 = vmul.bf16 %v677, %v709
      %v715 = vmul.bf16 %v678, %v708
      %719 = vrot.lane.b32.xlu0 %v713, 113
      %v720 = vpop.permute.xlu0 %719
      %721 = vrot.lane.b32.xlu0 %v714, 113
      %v722 = vpop.permute.xlu0 %721
      %723 = vrot.lane.b32.xlu0 %v715, 113
      %v724 = vpop.permute.xlu0 %723
      %v725 = vsel %vm536, %v720, %v722
      %v726 = vsel %vm536, %v722, %v724
      %729 = vst [vmem:[#allocation3 + $0x60] sm:$0xff] %v725
      %730 = vst [vmem:[#allocation3 + $0x68] sm:$0xff] %v726
      %v731 = vld [vmem:[#allocation2 + $0x8] sm:$0xff]
      %v732 = vld [vmem:[#allocation2 + $0x10] sm:$0xff]
      %v733 = vld [vmem:[#allocation2 + $0x18] sm:$0xff]
      %737 = vrot.lane.b32.xlu0 %v731, 112
      %v738 = vpop.permute.xlu0 %737
      %739 = vrot.lane.b32.xlu0 %v732, 112
      %v740 = vpop.permute.xlu0 %739
      %741 = vrot.lane.b32.xlu0 %v733, 112
      %v742 = vpop.permute.xlu0 %741
      %vm743 = vcmask 916480
      %v744 = vsel %vm743, %v738, %v740
      %v745 = vsel %vm743, %v740, %v742
      %748 = vst [vmem:[#allocation3 + $0x70] sm:$0xff] %v744
      %749 = vst [vmem:[#allocation3 + $0x78] sm:$0xff] %v745
      %v750 = vld [vmem:[#allocation2 + $0x8] sm:$0xff]
      %v751 = vld [vmem:[#allocation2 + $0x10] sm:$0xff]
      %v752 = vld [vmem:[#allocation2 + $0x18] sm:$0xff]
      %v753 = vld [vmem:[%s1] sm:$0xa]
      %v756 = vunpack.c.l.s4 1983009808
      %v757 = vunpack.c.0.s8 %v756
      %v758 = vlaneseq
      %v759 = vshrl.u32 %v758, 7
      %v760 = vsub.s32 %v757, %v759
      %v761 = vrot.slane %v753, %v760
      %v762 = vcombine.high %v761, %v761
      %v764 = vpack.i.b16 %v761, %v761
      %v766 = vlaneseq
      %v767 = vshrl.u32 %v766, 7
      %v768 = vsub.s32 1, %v767
      %v769 = vrot.slane %v764, %v768
      %v771 = vpack.i.b16 %v762, %v762
      %v773 = vlaneseq
      %v774 = vshrl.u32 %v773, 7
      %v775 = vsub.s32 1, %v774
      %v776 = vrot.slane %v771, %v775
      %779 = vrot.lane.b32.xlu0 %v769, 17
      %v780 = vpop.permute.xlu0 %779
      %781 = vrot.lane.b32.xlu0 %v776, 17
      %v782 = vpop.permute.xlu0 %781
      %v783 = vsel %vm477, %v780, %v782
      %v787 = vmul.bf16 %v750, %v780
      %v788 = vmul.bf16 %v751, %v783
      %v789 = vmul.bf16 %v752, %v782
      %793 = vrot.lane.b32.xlu0 %v787, 111
      %v794 = vpop.permute.xlu0 %793
      %795 = vrot.lane.b32.xlu0 %v788, 111
      %v796 = vpop.permute.xlu0 %795
      %797 = vrot.lane.b32.xlu0 %v789, 111
      %v798 = vpop.permute.xlu0 %797
      %v799 = vsel %vm460, %v794, %v796
      %v800 = vsel %vm460, %v796, %v798
      %803 = vst [vmem:[#allocation3 + $0x80] sm:$0xff] %v799
      %804 = vst [vmem:[#allocation3 + $0x88] sm:$0xff] %v800
      %v805 = vld [vmem:[%s5] sm:$0xff]
      %v806 = vld [vmem:[%s5 + $0x8] sm:$0xff]
      %v807 = vld [vmem:[#allocation3] sm:$0xff]
      %v808 = vld [vmem:[#allocation3 + $0x8] sm:$0xff]
      %v809 = vld [vmem:[#allocation3 + $0x10] sm:$0xff]
      %v810 = vld [vmem:[#allocation3 + $0x18] sm:$0xff]
      %v811 = vld [vmem:[#allocation3 + $0x20] sm:$0xff]
      %v812 = vld [vmem:[#allocation3 + $0x28] sm:$0xff]
      %v813 = vld [vmem:[#allocation3 + $0x30] sm:$0xff]
      %v814 = vld [vmem:[#allocation3 + $0x38] sm:$0xff]
      %v815 = vld [vmem:[#allocation3 + $0x40] sm:$0xff]
      %v816 = vld [vmem:[#allocation3 + $0x48] sm:$0xff]
      %v817 = vld [vmem:[#allocation3 + $0x50] sm:$0xff]
      %v818 = vld [vmem:[#allocation3 + $0x58] sm:$0xff]
      %v819 = vld [vmem:[#allocation3 + $0x60] sm:$0xff]
      %v820 = vld [vmem:[#allocation3 + $0x68] sm:$0xff]
      %v821 = vld [vmem:[#allocation3 + $0x70] sm:$0xff]
      %v822 = vld [vmem:[#allocation3 + $0x78] sm:$0xff]
      %v823 = vld [vmem:[#allocation3 + $0x80] sm:$0xff]
      %v824 = vld [vmem:[#allocation3 + $0x88] sm:$0xff]
      %v825 = vld [vmem:[%s6] sm:$0xff]
      %v826 = vld [vmem:[%s6 + $0x8] sm:$0xff]
      %828 = vset.pattern.permute.xlu0 0
      %829 = vperm.xlu0 %828, %v825
      %v830 = vpop.permute.xlu0 %829
      %833 = vset.pattern.permute.xlu0 0
      %834 = vperm.xlu0 %833, %v826
      %v835 = vpop.permute.xlu0 %834
      %v839 = vunpack.c.l.b16 %v805
      %v840 = vunpack.c.h.b16 %v805
      %v841 = vunpack.c.l.b16 %v806
      %v842 = vunpack.c.h.b16 %v806
      %v843 = vpack.c.b16 %v841, %v839
      %v844 = vpack.c.b16 %v842, %v840
      %vm846 = vcmask 130048
      %v848 = vsel %vm846, %v844, 0
      %850 = vmatprep.subr.bf16.mxu0 %v808
      %851 = vmatpush1.bf16.msra.mxu0 %v807
      %852 = vmatprep.subr.bf16.mxu0 %v810
      %853 = vmatpush1.bf16.msra.mxu0 %v809
      %854 = vmatprep.subr.bf16.mxu0 %v812
      %855 = vmatpush1.bf16.msra.mxu0 %v811
      %856 = vmatprep.subr.bf16.mxu0 %v814
      %857 = vmatpush1.bf16.msra.mxu0 %v813
      %858 = vmatprep.subr.bf16.mxu0 %v816
      %859 = vmatpush1.bf16.msra.mxu0 %v815
      %860 = vmatprep.subr.bf16.mxu0 %v818
      %861 = vmatpush1.bf16.msra.mxu0 %v817
      %862 = vmatprep.subr.bf16.mxu0 %v820
      %863 = vmatpush1.bf16.msra.mxu0 %v819
      %864 = vmatprep.subr.bf16.mxu0 %v822
      %865 = vmatpush1.bf16.msra.mxu0 %v821
      %866 = vmatprep.subr.bf16.mxu0 %v824
      %867 = vmatpush1.bf16.msra.mxu0 %v823
      %868 = vmatprep.subr.bf16.mxu0 0
      %869 = vmatpush1.bf16.msra.mxu0 0
      %870 = vmatprep.subr.bf16.mxu0 0
      %871 = vmatpush1.bf16.msra.mxu0 0
      %872 = vmatprep.subr.bf16.mxu0 0
      %873 = vmatpush1.bf16.msra.mxu0 0
      %874 = vmatprep.subr.bf16.mxu0 0
      %875 = vmatpush1.bf16.msra.mxu0 0
      %876 = vmatprep.subr.bf16.mxu0 0
      %877 = vmatpush1.bf16.msra.mxu0 0
      %878 = vmatprep.subr.bf16.mxu0 0
      %879 = vmatpush1.bf16.msra.mxu0 0
      %880 = vmatprep.subr.bf16.mxu0 0
      %881 = vmatpush1.bf16.msra.mxu0 0
      %882 = vmatprep.mubr.bf16.mxu0 %v848
      %883 = vmatmul.mubr.bf16.gmra.mrb[0].mxu0 %v843
      %v884 = vpop.f32.mrb[0].mxu0
      %v885 = vadd.f32 %v830, %v884
      %v886 = vpop.f32.mrb[0].mxu0
      %v887 = vadd.f32 %v830, %v886
      %v888 = vpop.f32.mrb[0].mxu0
      %v889 = vadd.f32 %v835, %v888
      %v890 = vpop.f32.mrb[0].mxu0
      %v891 = vadd.f32 %v835, %v890
      %892 = vdwg.mxu0
      %v893 = vmax.f32 %v885, 0.0
      %v894 = vmax.f32 %v887, 0.0
      %v895 = vmax.f32 %v889, 0.0
      %v896 = vmax.f32 %v891, 0.0
      %v897 = vld [vmem:[%s7] sm:$0xf]
      %v898 = vpack.c.bf16 %v895, %v893
      %v899 = vpack.c.bf16 %v896, %v894
      %v900 = vld [vmem:[%s8] sm:$0xff]
      %902 = vset.pattern.permute.xlu0 0
      %903 = vperm.xlu0 %902, %v900
      %v904 = vpop.permute.xlu0 %903
      %v907 = vsel %vm846, %v897, 0
      %909 = vmatprep.subr.bf16.mxu0 %v899
      %910 = vmatpush1.bf16.msra.mxu0 %v898
      %911 = vmatprep.subr.bf16.mxu0 0
      %912 = vmatpush1.bf16.msra.mxu0 0
      %913 = vmatprep.subr.bf16.mxu0 0
      %914 = vmatpush1.bf16.msra.mxu0 0
      %915 = vmatprep.subr.bf16.mxu0 0
      %916 = vmatpush1.bf16.msra.mxu0 0
      %917 = vmatprep.subr.bf16.mxu0 0
      %918 = vmatpush1.bf16.msra.mxu0 0
      %919 = vmatprep.subr.bf16.mxu0 0
      %920 = vmatpush1.bf16.msra.mxu0 0
      %921 = vmatprep.subr.bf16.mxu0 0
      %922 = vmatpush1.bf16.msra.mxu0 0
      %923 = vmatprep.subr.bf16.mxu0 0
      %924 = vmatpush1.bf16.msra.mxu0 0
      %925 = vmatprep.subr.bf16.mxu0 0
      %926 = vmatpush1.bf16.msra.mxu0 0
      %927 = vmatprep.subr.bf16.mxu0 0
      %928 = vmatpush1.bf16.msra.mxu0 0
      %929 = vmatprep.subr.bf16.mxu0 0
      %930 = vmatpush1.bf16.msra.mxu0 0
      %931 = vmatprep.subr.bf16.mxu0 0
      %932 = vmatpush1.bf16.msra.mxu0 0
      %933 = vmatprep.subr.bf16.mxu0 0
      %934 = vmatpush1.bf16.msra.mxu0 0
      %935 = vmatprep.subr.bf16.mxu0 0
      %936 = vmatpush1.bf16.msra.mxu0 0
      %937 = vmatprep.subr.bf16.mxu0 0
      %938 = vmatpush1.bf16.msra.mxu0 0
      %939 = vmatprep.subr.bf16.mxu0 0
      %940 = vmatpush1.bf16.msra.mxu0 0
      %941 = vmatprep.mubr.bf16.mxu0 0
      %942 = vmatmul.mubr.bf16.gmra.mrb[0].mxu0 %v907
      %v943 = vpop.f32.mrb[0].mxu0
      %v944 = vadd.f32 %v904, %v943
      %v945 = vpop.f32.mrb[0].mxu0
      %v946 = vadd.f32 %v904, %v945
      %v947 = vpop.f32.mrb[0].mxu0
      %v948 = vpop.f32.mrb[0].mxu0
      %949 = vdwg.mxu0
      %v950 = vmax.f32 %v944, 0.0
      %v951 = vmax.f32 %v946, 0.0
      %952 = vst [vmem:[%s332] sm:$0xff] %v950
      %953 = vst [vmem:[%s332 + $0x8] sm:$0xff] %v951
      %p954 = scmp.lt.s32.totalorder %s20, 1
      %s955 = scalar_select %p954, %s20, 1
      %s956 = smul.addr %s955, 2
      %s957 = smul.addr %s956, 8
      %s958 = scalar_lea.vmem %s9, %s957
      // Predicated region
      $region57: #{conv_block_forward.1} parent=55 // pred_check
        %p959 = pneg %p232
      $region58: #{conv_block_forward.1} parent=55 // pred_check_branch
        %961 = sbr.rel (%p959) target = $region60
      $region59: #{conv_block_forward.1} parent=55 // pred_region
        _
      $region60: #{conv_block_forward.1} parent=55 // pred_fallthru
        _
    $region56: #{conv_block_forward.1} parent=5 // pred_fallthru
      _
    %p962 = scmp.le.s32.totalorder 2, %s15
    // Predicated region
    $region61: #{conv_block_forward.1} parent=5 // pred_check
      %p963 = pneg %p962
    $region62: #{conv_block_forward.1} parent=5 // pred_check_branch
      %965 = sbr.rel (%p963) target = $region64
    $region63: #{conv_block_forward.1} parent=5 // pred_region
      %s966 = ssub.s32 %s15, 2
      // Predicated region
      $region65: #{conv_block_forward.1} parent=63 // pred_check
        %p967 = pneg %p238
      $region66: #{conv_block_forward.1} parent=63 // pred_check_branch
        %969 = sbr.rel (%p967) target = $region68
      $region67: #{conv_block_forward.1} parent=63 // pred_region
        %p970 = scmp.lt.s32.totalorder %s21, 1
        %s971 = scalar_select %p970, %s21, 1
        %s972 = smul.addr %s971, 2
        %s973 = smul.addr %s972, 8
        %s974 = scalar_lea.vmem %s9, %s973
      $region68: #{conv_block_forward.1} parent=63 // pred_fallthru
        _
    $region64: #{conv_block_forward.1} parent=5 // pred_fallthru
      _
  $region6: #{conv_block_forward.1} parent=0 // loop_footer
    %s19 = sadd.s32 1, %s15
  $region7: #{conv_block_forward.1} parent=0 // loop_footer_branch
    %14 = sbr.rel target = $region3
  $region8: #{conv_block_forward.1} parent=0 // loop_exit
    _

</llo_original>
